<compile_context>
chip_gen: v5e
topology: v5e:2x2
jax: 0.10.0
libtpu: 0.0.40
codegen_flags: <defaults>
</compile_context>

<pallas_src>
import numpy as np
import jax
import jax.numpy as jnp
from jax.experimental import pallas as pl
from jax.experimental.pallas import tpu as pltpu


def _round_up(x, m):
    return (x + m - 1) // m * m


_VMEM_LIMIT = 48 * 1024 * 1024


# ----------------------------------------------------------------------------
# Pallas kernels
# ----------------------------------------------------------------------------
def _feature_gram_kernel(a2_ref, z1_ref, z2t_ref, o_ref):
    """One (TM, TN) output tile of K = a2 * (Z1 @ Z2.T).  a2 is an SMEM scalar."""
    s = jnp.dot(z1_ref[...], z2t_ref[...], preferred_element_type=jnp.float32)
    o_ref[...] = a2_ref[0, 0] * s


def _feature_diag_kernel(a2_ref, z1_ref, z2_ref, o_ref):
    """One (TM, 1) tile of the diag path: a2 * sum(Z1 * Z2, axis=1)."""
    o_ref[...] = a2_ref[0, 0] * jnp.sum(
        z1_ref[...] * z2_ref[...], axis=1, keepdims=True)


# ----------------------------------------------------------------------------
# pallas_call wrappers
# ----------------------------------------------------------------------------
def feature_kernel_gram(Z1, Z2, a2, *, tm=256, tn=1024):
    """Z1: (N1, F), Z2: (N2, F), a2 scalar  ->  (N1, N2) = a2 * Z1 @ Z2.T."""
    Z1 = Z1.astype(jnp.float32)
    Z2 = Z2.astype(jnp.float32)
    N1, F = Z1.shape
    N2 = Z2.shape[0]
    tm = min(tm, _round_up(N1, 8))      # sublane multiple of 8
    tn = min(tn, _round_up(N2, 128))    # lane-dense multiple of 128
    Z2T = Z2.T                          # (F, N2): N2 on the lane axis of the output
    a2_arr = jnp.full((1, 1), a2, jnp.float32)
    return pl.pallas_call(
        _feature_gram_kernel,
        out_shape=jax.ShapeDtypeStruct((N1, N2), jnp.float32),
        grid=(pl.cdiv(N1, tm), pl.cdiv(N2, tn)),
        in_specs=[
            pl.BlockSpec(memory_space=pltpu.MemorySpace.SMEM),   # a2 scalar
            pl.BlockSpec((tm, F), lambda i, j: (i, 0)),          # full feature dim
            pl.BlockSpec((F, tn), lambda i, j: (0, j)),
        ],
        out_specs=pl.BlockSpec((tm, tn), lambda i, j: (i, j)),
        compiler_params=pltpu.CompilerParams(
            dimension_semantics=("parallel", "parallel"),
            vmem_limit_bytes=_VMEM_LIMIT),
    )(a2_arr, Z1, Z2T)


def feature_kernel_diag(Z1, Z2, a2, *, tm=512):
    """Per-row a2 * <Z1_i, Z2_i>  ->  (N,)."""
    Z1 = Z1.astype(jnp.float32)
    Z2 = Z2.astype(jnp.float32)
    N, F = Z1.shape
    tm = min(tm, _round_up(N, 8))
    a2_arr = jnp.full((1, 1), a2, jnp.float32)
    out = pl.pallas_call(
        _feature_diag_kernel,
        out_shape=jax.ShapeDtypeStruct((N, 1), jnp.float32),
        grid=(pl.cdiv(N, tm),),
        in_specs=[
            pl.BlockSpec(memory_space=pltpu.MemorySpace.SMEM),
            pl.BlockSpec((tm, F), lambda i: (i, 0)),
            pl.BlockSpec((tm, F), lambda i: (i, 0)),
        ],
        out_specs=pl.BlockSpec((tm, 1), lambda i: (i, 0)),
        compiler_params=pltpu.CompilerParams(
            dimension_semantics=("parallel",),
            vmem_limit_bytes=_VMEM_LIMIT),
    )(a2_arr, Z1, Z2)
    return out[:, 0]


# ----------------------------------------------------------------------------
# Module-equivalent wrapper
# ----------------------------------------------------------------------------
class FeatureKernelPallas:
    """JAX/Pallas equivalent of the PyTorch FeatureKernel module."""

    def __init__(self, phi_func, weight_var=1.0):
        self.phi_func = phi_func
        self.logwvar = jnp.float32(np.log(weight_var))   # Hyperparameter(log(weight_var))

    def get_weight_var(self):
        return jnp.exp(self.logwvar)

    def __call__(self, X1, X2=None, diag=False):
        a2 = self.get_weight_var()
        # TODO(synk): phi_func is an arbitrary user-supplied callable; it is applied
        # as plain JAX here (O(N*F)) — only the O(N1*N2) Gram product runs in Pallas.
        Z1 = self.phi_func(X1)
        Z2 = Z1 if X2 is None else self.phi_func(X2)
        if diag:
            return feature_kernel_diag(Z1, Z2, a2)
        return feature_kernel_gram(Z1, Z2, a2)


# ----------------------------------------------------------------------------
# NumPy reference (mirrors the PyTorch forward exactly, given Z = phi(X))
# ----------------------------------------------------------------------------
def ref_feature_kernel(Z1, Z2, a2, diag=False):
    Z1 = np.asarray(Z1, np.float64)
    Z2 = Z1 if Z2 is None else np.asarray(Z2, np.float64)
    if diag:
        return np.sum(Z1 * (a2 * Z2), 1)
    return Z1 @ (a2 * Z2.T)


def make_phi(key, dim, n_feat):
    """Deterministic example feature map: phi(X) = tanh(X @ W + b)."""
    kw, kb = jax.random.split(key)
    W = jax.random.normal(kw, (dim, n_feat), jnp.float32) / np.sqrt(dim)
    b = jax.random.normal(kb, (1, n_feat), jnp.float32)

    def phi(X):
        return jnp.tanh(X.astype(jnp.float32) @ W + b)

    return phi


if __name__ == "__main__":
    dim, n_feat = 4, 32
    N1, N2 = 16, 12          # N2=12 exercises the ragged (masked) lane edge

    key = jax.random.PRNGKey(0)
    kphi, k1, k2 = jax.random.split(key, 3)
    phi = make_phi(kphi, dim, n_feat)
    X1 = jax.random.normal(k1, (N1, dim), jnp.float32)
    X2 = jax.random.normal(k2, (N2, dim), jnp.float32)
    X1b = X1 + 0.25           # second input of matching shape for the diag(X1, X2) path

    kern = FeatureKernelPallas(phi, weight_var=1.7)

    K12 = kern(X1, X2)              # cross Gram          (N1, N2)
    K11 = kern(X1)                  # self Gram           (N1, N1)
    Kdg = kern(X1, diag=True)       # diag, X2=None       (N1,)
    Kdg2 = kern(X1, X1b, diag=True) # diag, X2 given      (N1,)
    jax.block_until_ready((K12, K11, Kdg, Kdg2))

    # reference
    a2 = float(kern.get_weight_var())
    Z1np = np.asarray(phi(X1))
    Z2np = np.asarray(phi(X2))
    Z1bnp = np.asarray(phi(X1b))

    np.testing.assert_allclose(np.asarray(K12), ref_feature_kernel(Z1np, Z2np, a2),
                               rtol=1e-4, atol=1e-4)
    np.testing.assert_allclose(np.asarray(K11), ref_feature_kernel(Z1np, None, a2),
                               rtol=1e-4, atol=1e-4)
    np.testing.assert_allclose(np.asarray(Kdg),
                               ref_feature_kernel(Z1np, None, a2, diag=True),
                               rtol=1e-4, atol=1e-4)
    np.testing.assert_allclose(np.asarray(Kdg2),
                               ref_feature_kernel(Z1np, Z1bnp, a2, diag=True),
                               rtol=1e-4, atol=1e-4)

    print("KERNEL_OK")
</pallas_src>

<mosaic_0001>
module attributes {stable_mosaic.version = 11 : i64} {
  func.func @_feature_gram_kernel(%arg0: i32, %arg1: i32, %arg2: memref<1x1xf32, #tpu.memory_space<smem>>, %arg3: memref<16x32xf32, #tpu.memory_space<vmem>>, %arg4: memref<32x128xf32, #tpu.memory_space<vmem>>, %arg5: memref<16x128xf32, #tpu.memory_space<vmem>>) attributes {dimension_semantics = [#tpu.dimension_semantics<parallel>, #tpu.dimension_semantics<parallel>], iteration_bounds = array<i64: 1, 1>, scalar_prefetch = 0 : i64, scratch_operands = 0 : i64, tpu.core_type = #tpu.core_type<tc>, window_params = [{transform_indices = @transform_0, window_bounds = array<i64: 1, 1>}, {transform_indices = @transform_1, window_bounds = array<i64: 16, 32>}, {transform_indices = @transform_2, window_bounds = array<i64: 32, 128>}, {transform_indices = @transform_3, window_bounds = array<i64: 16, 128>}]} {
    %c0 = arith.constant 0 : index
    %c0_0 = arith.constant 0 : index
    %0 = vector.load %arg3[%c0, %c0_0] : memref<16x32xf32, #tpu.memory_space<vmem>>, vector<16x32xf32>
    %c0_1 = arith.constant 0 : index
    %c0_2 = arith.constant 0 : index
    %1 = vector.load %arg4[%c0_1, %c0_2] : memref<32x128xf32, #tpu.memory_space<vmem>>, vector<32x128xf32>
    %cst = arith.constant dense<0.000000e+00> : vector<16x128xf32>
    %2 = tpu.matmul %0, %1, %cst {dimension_numbers = #tpu.dot_dimension_numbers<[1], [0], [0], [1], [0, 0, 1, 1], [], []>} : vector<16x32xf32>, vector<32x128xf32>, vector<16x128xf32> -> vector<16x128xf32>
    %c0_3 = arith.constant 0 : index
    %c0_4 = arith.constant 0 : index
    %3 = memref.load %arg2[%c0_3, %c0_4] : memref<1x1xf32, #tpu.memory_space<smem>>
    %4 = vector.broadcast %3 : f32 to vector<16x128xf32>
    %5 = arith.mulf %4, %2 : vector<16x128xf32>
    %c0_5 = arith.constant 0 : index
    %c0_6 = arith.constant 0 : index
    %6 = vector.load %arg5[%c0_5, %c0_6] : memref<16x128xf32, #tpu.memory_space<vmem>>, vector<16x128xf32>
    tpu.vector_store %arg5[%c0_5, %c0_6], %5 {strides = array<i32>} : memref<16x128xf32, #tpu.memory_space<vmem>>, vector<16x128xf32>,
    return
  }
  func.func @transform_0(%arg0: i32, %arg1: i32) -> (i32, i32) {
    %c0_i32 = arith.constant 0 : i32
    %c0_i32_0 = arith.constant 0 : i32
    %c0_i32_1 = arith.constant 0 : i32
    return %c0_i32, %c0_i32_0 : i32, i32
  }
  func.func @transform_1(%arg0: i32, %arg1: i32) -> (i32, i32) {
    %c0_i32 = arith.constant 0 : i32
    %c0_i32_0 = arith.constant 0 : i32
    return %arg0, %c0_i32 : i32, i32
  }
  func.func @transform_2(%arg0: i32, %arg1: i32) -> (i32, i32) {
    %c0_i32 = arith.constant 0 : i32
    %c0_i32_0 = arith.constant 0 : i32
    return %c0_i32, %arg1 : i32, i32
  }
  func.func @transform_3(%arg0: i32, %arg1: i32) -> (i32, i32) {
    %c0_i32 = arith.constant 0 : i32
    return %arg0, %arg1 : i32, i32
  }
}

</mosaic_0001>

<llo_original>
// kernel: tpu_custom_call.1
$region0: #{tpu_custom_call.1}
  #allocation0 [shape = 'u32[]', space=smem, size = 0x4, offset = 0x4, fixed_abs, tag = 'smem constant byte address 0x4 - core index']
  #allocation1 [shape = 'u32[72,128]{1,0:T(1,128)}', space=vmem, size = 0x9000, scoped, tag = 'internal scratch']
  #allocation2 [shape = 'f32[1,1]{1,0:T(1,128)S(6)}', space=smem, size = 0x200, scoped, tag = 'scoped memory for tpu_custom_call.1']
  %s0 = inlined_call_operand.<no memory space> [shape: f32[1,1], index: 0, kind: input, shape index: {}]
  %s1 = inlined_call_operand.vmem [shape: f32[16,32], index: 1, kind: input, shape index: {}]
  %s2 = inlined_call_operand.vmem [shape: f32[32,12], index: 2, kind: input, shape index: {}]
  %s3 = inlined_call_operand.hbm [shape: f32[16,12], index: 3, kind: output, shape index: {}]
  %s4 = sld [smem:[#allocation0]]
  $region22: #{tpu_custom_call.1} parent=0
    _
  %s6 = ssub.s32 1, %s4
  %s7 = scalar_select 0, %s6, %s4
  %8 = sst [smem:[#allocation2]] %s0
  $region1: #{tpu_custom_call.1} parent=0
    #allocation3 [shape = 'u8[8192]{0}', space=vmem, size = 0x2000, scoped, tag = 'output window, operand 0, single buffered']
    #allocation4 [shape = 's32[1]{0}', space=sflag, size = 0x4, scoped, tag = 'scoped memory for tpu_custom_call.1']
    %9 = vsyncpa [#allocation4], 0
    // Predicated region
    $region2: #{tpu_custom_call.1} parent=1 // pred_check
      _
    $region3: #{tpu_custom_call.1} parent=1 // pred_check_branch
      %11 = sbr.rel (0) target = $region5
    $region4: #{tpu_custom_call.1} parent=1 // pred_region
      _
    $region5: #{tpu_custom_call.1} parent=1 // pred_fallthru
      _
    // Predicated region
    $region6: #{tpu_custom_call.1} parent=1 // pred_check
      _
    $region7: #{tpu_custom_call.1} parent=1 // pred_check_branch
      %13 = sbr.rel (0) target = $region9
    $region8: #{tpu_custom_call.1} parent=1 // pred_region
      _
    $region9: #{tpu_custom_call.1} parent=1 // pred_fallthru
      _
    // Predicated region
    $region10: #{tpu_custom_call.1} parent=1 // pred_check
      _
    $region11: #{tpu_custom_call.1} parent=1 // pred_check_branch
      %15 = sbr.rel (0) target = $region13
    $region12: #{tpu_custom_call.1} parent=1 // pred_region
      _
    $region13: #{tpu_custom_call.1} parent=1 // pred_fallthru
      _
    %v16 = vld [vmem:[%s1] sm:$0xff]
    %v17 = vld [vmem:[%s1 + $0x8] sm:$0xff]
    %v18 = vld [vmem:[%s2] sm:$0xff]
    %v19 = vld [vmem:[%s2 + $0x8] sm:$0xff]
    %v20 = vld [vmem:[%s2 + $0x10] sm:$0xff]
    %v21 = vld [vmem:[%s2 + $0x18] sm:$0xff]
    %vm22 = vcmask 261120
    %v24 = vsel %vm22, %v16, 0
    %v27 = vsel %vm22, %v17, 0
    %29 = vmatpush.msra.mxu0 0.0
    %30 = vmatpush.msra.mxu0 0.0
    %31 = vmatpush.msra.mxu0 0.0
    %32 = vmatpush.msra.mxu0 0.0
    %33 = vmatpush.msra.mxu0 0.0
    %34 = vmatpush.msra.mxu0 0.0
    %35 = vmatpush.msra.mxu0 0.0
    %36 = vmatpush.msra.mxu0 0.0
    %37 = vmatpush.msra.mxu0 0.0
    %38 = vmatpush.msra.mxu0 0.0
    %39 = vmatpush.msra.mxu0 0.0
    %40 = vmatpush.msra.mxu0 0.0
    %41 = vmatpush.msra.mxu0 %v21
    %42 = vmatpush.msra.mxu0 %v20
    %43 = vmatpush.msra.mxu0 %v19
    %44 = vmatpush.msra.mxu0 %v18
    %45 = vmatmul.f32.gmra.mxu0 %v24
    %v46 = vpop.f32.mrf.mxu0
    %v47 = vadd.f32 0.0, %v46
    %48 = vmatmul.f32.gmra.mxu0 %v27
    %v49 = vpop.f32.mrf.mxu0
    %v50 = vadd.f32 0.0, %v49
    %51 = vdwg.mxu0
    %s52 = sld [smem:[#allocation2]]
    %v53 = vstv %s52
    %v54 = vmul.f32 %v53, %v47
    %v55 = vmul.f32 %v53, %v50
    %56 = vst [vmem:[#allocation3] sm:$0xff] %v54
    %57 = vst [vmem:[#allocation3 + $0x8] sm:$0xff] %v55
    // Predicated region
    $region14: #{tpu_custom_call.1} parent=1 // pred_check
      _
    $region15: #{tpu_custom_call.1} parent=1 // pred_check_branch
      %59 = sbr.rel (0) target = $region17
    $region16: #{tpu_custom_call.1} parent=1 // pred_region
      %61 = vsyncadd [#allocation4], 0
      %s62 = sshll.u32 [#allocation3], 4
      %s63 = int_to_ptr.vmem [resolvable:$true] %s62
      %s64 = sshll.u32 %s3, 4
      %s65 = int_to_ptr.hbm [resolvable:$true] %s64
      %70 = dma.vmem_to_hbm [thread:$0]  %s63, 256, %s65, [#allocation4], 128, 128, 8
    $region17: #{tpu_custom_call.1} parent=1 // pred_fallthru
      _
    // Predicated region
    $region18: #{tpu_custom_call.1} parent=1 // pred_check
      _
    $region19: #{tpu_custom_call.1} parent=1 // pred_check_branch
      %72 = sbr.rel (0) target = $region21
    $region20: #{tpu_custom_call.1} parent=1 // pred_region
      %74 = dma.done [#allocation4], 256
    $region21: #{tpu_custom_call.1} parent=1 // pred_fallthru
      _
    %75 = vsyncpa [#allocation4], 1

</llo_original>
